<compile_context>
chip_gen: v6e
topology: v6e:2x2x1
jax: 0.10.0
libtpu: 0.0.40
codegen_flags: <defaults>
</compile_context>

<pallas_src>
import math
from functools import partial, lru_cache

import jax
import jax.numpy as jnp
from jax.experimental import pallas as pl
from jax.experimental.pallas import tpu as pltpu


# ----------------------------------------------------------------------------
# helpers
# ----------------------------------------------------------------------------

def _round_up(x, m):
    return ((x + m - 1) // m) * m


@lru_cache(maxsize=None)
def _vmem_limit_bytes():
    """Generation-aware VMEM cap (v7x only has 64 MiB per TensorCore)."""
    try:
        cap = int(pltpu.get_tpu_info().vmem_capacity_bytes)
    except Exception:
        cap = 64 << 20
    return int(min(cap * 3 // 4, 96 << 20))


# ----------------------------------------------------------------------------
# Pallas kernels
# ----------------------------------------------------------------------------

def _matmul_fused_k1_kernel(*refs, apply_relu, has_residual):
    """Single-K-step path: out = act(a @ b + bias [+ residual]) in ONE write."""
    if has_residual:
        a_ref, b_ref, bias_ref, res_ref, o_ref = refs
    else:
        a_ref, b_ref, bias_ref, o_ref = refs
        res_ref = None
    acc = jnp.dot(a_ref[...], b_ref[...], preferred_element_type=jnp.float32)
    acc = acc + bias_ref[...]
    if res_ref is not None:
        acc = acc + res_ref[...].astype(jnp.float32)
    if apply_relu:
        acc = jnp.maximum(acc, 0.0)
    o_ref[...] = acc.astype(o_ref.dtype)


def _matmul_fused_kacc_kernel(*refs, apply_relu, has_residual):
    """General K>1 path: f32 VMEM scratch accumulator, bf16/f32 final write.

    Write (not zero-init + accumulate) at k == 0; epilogue only at the last
    K step.  Never triggered for ResNet-18 shapes at this problem size, kept
    for portability.
    """
    if has_residual:
        a_ref, b_ref, bias_ref, res_ref, o_ref, acc_ref = refs
    else:
        a_ref, b_ref, bias_ref, o_ref, acc_ref = refs
        res_ref = None

    k = pl.program_id(2)
    part = jnp.dot(a_ref[...], b_ref[...], preferred_element_type=jnp.float32)

    @pl.when(k == 0)
    def _first():
        acc_ref[...] = part

    @pl.when(k != 0)
    def _accum():
        acc_ref[...] += part

    @pl.when(k == pl.num_programs(2) - 1)
    def _finish():
        out = acc_ref[...] + bias_ref[...]
        if res_ref is not None:
            out = out + res_ref[...].astype(jnp.float32)
        if apply_relu:
            out = jnp.maximum(out, 0.0)
        o_ref[...] = out.astype(o_ref.dtype)


def _max_reduce_kernel(x_ref, o_ref):
    # x: (9, tr, 128) stacked 3x3-window views -> elementwise max over windows.
    o_ref[...] = jnp.max(x_ref[...], axis=0)


# ----------------------------------------------------------------------------
# Pallas wrappers
# ----------------------------------------------------------------------------

def matmul_fused(a, b, bias, residual=None, apply_relu=False,
                 out_dtype=jnp.bfloat16):
    """act( a @ b + bias [+ residual] ), bf16 MXU inputs, f32 accumulation."""
    M, K = a.shape
    K2, N = b.shape
    assert K == K2

    # M: multiple of 16 (bf16 sublane packing), capped at 256.
    tm = min(256, _round_up(M, 16))
    M_pad = _round_up(M, tm)

    # N: lane-dense output (multiple of 128); 256-wide tiles feed the v6e/v7x
    # 256x256 MXUs.
    N_pad = _round_up(N, 128)
    tn = 256 if N_pad % 256 == 0 else 128

    # K: one long contraction (full K) where the double-buffered bf16 B block
    # fits the generation VMEM budget; otherwise split to a multiple of 128.
    vmem = _vmem_limit_bytes()
    max_tk = max(512, ((vmem // 3) // (2 * tn * 2)) // 128 * 128)
    K_pad = _round_up(K, 128)
    if K_pad <= max_tk:
        tk = K_pad
    else:
        n_k = -(-K_pad // max_tk)
        tk = _round_up(-(-K_pad // n_k), 128)
        K_pad = _round_up(K_pad, tk)

    # v7x has 2 TensorCores: avoid a (1, 1) parallel grid where possible
    # (split N first, else split M).  Extra grid step is ~free on v5e/v6e
    # since these layers are weight-DMA-bound.
    if (M_pad // tm) * (N_pad // tn) == 1:
        if N_pad // 128 >= 2:
            tn = 128
        elif M_pad >= 32 and (M_pad // 2) % 16 == 0:
            tm = M_pad // 2

    a_p = jnp.pad(a, ((0, M_pad - M), (0, K_pad - K))).astype(jnp.bfloat16)
    b_p = jnp.pad(b, ((0, K_pad - K), (0, N_pad - N))).astype(jnp.bfloat16)
    bias_p = jnp.pad(bias.astype(jnp.float32), (0, N_pad - N)).reshape(1, N_pad)

    has_residual = residual is not None
    single_k = (K_pad // tk) == 1

    inputs = [a_p, b_p, bias_p]
    if single_k:
        in_specs = [
            pl.BlockSpec((tm, tk), lambda i, j: (i, 0)),
            pl.BlockSpec((tk, tn), lambda i, j: (0, j)),
            pl.BlockSpec((1, tn), lambda i, j: (0, j)),
        ]
        out_spec = pl.BlockSpec((tm, tn), lambda i, j: (i, j))
        grid = (M_pad // tm, N_pad // tn)
        dim_sem = ("parallel", "parallel")
        scratch = []
        kernel = partial(_matmul_fused_k1_kernel,
                         apply_relu=apply_relu, has_residual=has_residual)
    else:
        in_specs = [
            pl.BlockSpec((tm, tk), lambda i, j, k: (i, k)),
            pl.BlockSpec((tk, tn), lambda i, j, k: (k, j)),
            pl.BlockSpec((1, tn), lambda i, j, k: (0, j)),
        ]
        out_spec = pl.BlockSpec((tm, tn), lambda i, j, k: (i, j))
        grid = (M_pad // tm, N_pad // tn, K_pad // tk)
        dim_sem = ("parallel", "parallel", "arbitrary")
        scratch = [pltpu.VMEM((tm, tn), jnp.float32)]
        kernel = partial(_matmul_fused_kacc_kernel,
                         apply_relu=apply_relu, has_residual=has_residual)

    if has_residual:
        res_p = jnp.pad(residual, ((0, M_pad - M), (0, N_pad - N))
                        ).astype(jnp.bfloat16)
        inputs.append(res_p)
        if single_k:
            in_specs.append(pl.BlockSpec((tm, tn), lambda i, j: (i, j)))
        else:
            in_specs.append(pl.BlockSpec((tm, tn), lambda i, j, k: (i, j)))

    out = pl.pallas_call(
        kernel,
        out_shape=jax.ShapeDtypeStruct((M_pad, N_pad), out_dtype),
        grid_spec=pltpu.PrefetchScalarGridSpec(
            num_scalar_prefetch=0,
            grid=grid,
            in_specs=in_specs,
            out_specs=out_spec,
            scratch_shapes=scratch,
        ),
        compiler_params=pltpu.CompilerParams(
            dimension_semantics=dim_sem,
            vmem_limit_bytes=_vmem_limit_bytes(),
        ),
    )(*inputs)
    return out[:M, :N]


def conv2d_bn_act(x_nhwc, w_oihw, bn_scale, bn_bias, stride, padding,
                  apply_relu, residual_nhwc=None):
    """Conv2d (bias-free) + folded BatchNorm + optional residual + ReLU (bf16 out)."""
    N, H, W, C = x_nhwc.shape
    O, Ci, kh, kw = w_oihw.shape
    assert Ci == C
    Hout = (H + 2 * padding - kh) // stride + 1
    Wout = (W + 2 * padding - kw) // stride + 1

    # im2col in bf16 (activations stay bf16 end-to-end).
    # TODO(synk): folding the kh*kw taps into the K grid axis (shifted-window
    # index_maps) would avoid the 9x activation materialization for the
    # stride-1 3x3 convs; patch extraction stays as XLA glue for now.
    xp = jnp.pad(x_nhwc.astype(jnp.bfloat16),
                 ((0, 0), (padding, padding), (padding, padding), (0, 0)))
    patches = []
    for i in range(kh):
        for j in range(kw):
            v = xp[:, i:i + stride * (Hout - 1) + 1:stride,
                   j:j + stride * (Wout - 1) + 1:stride, :]
            patches.append(v)
    # feature order: (kh, kw, C)
    a = jnp.concatenate(patches, axis=-1).reshape(N * Hout * Wout, kh * kw * C)

    # weight (O, C, kh, kw) -> (kh, kw, C, O) -> (kh*kw*C, O); fold BN scale.
    w = jnp.transpose(w_oihw, (2, 3, 1, 0)).reshape(kh * kw * C, O)
    w = (w * bn_scale[None, :]).astype(jnp.bfloat16)

    res2d = None
    if residual_nhwc is not None:
        res2d = residual_nhwc.reshape(N * Hout * Wout, O)

    out = matmul_fused(a, w, bn_bias, residual=res2d, apply_relu=apply_relu,
                       out_dtype=jnp.bfloat16)
    return out.reshape(N, Hout, Wout, O)


def maxpool_3x3_s2_p1(x_nhwc):
    """MaxPool2d(3, stride=2, padding=1) on a lane-dense (rows, 128) slab."""
    N, H, W, C = x_nhwc.shape
    Hout = (H + 2 - 3) // 2 + 1
    Wout = (W + 2 - 3) // 2 + 1
    neg = -jnp.inf
    xp = jnp.pad(x_nhwc, ((0, 0), (1, 1), (1, 1), (0, 0)),
                 constant_values=neg)
    views = []
    for i in range(3):
        for j in range(3):
            v = xp[:, i:i + 2 * (Hout - 1) + 1:2, j:j + 2 * (Wout - 1) + 1:2, :]
            views.append(v.reshape(-1))
    stacked = jnp.stack(views, axis=0)           # (9, M*C), bf16

    total = N * Hout * Wout * C
    lanes = 128                                  # lane-dense: trailing dim 128
    rows = -(-total // lanes)
    tr = min(512, _round_up(rows, 8))
    rows_pad = _round_up(rows, tr)
    stacked = jnp.pad(stacked, ((0, 0), (0, rows_pad * lanes - total)),
                      constant_values=neg).reshape(9, rows_pad, lanes)

    out = pl.pallas_call(
        _max_reduce_kernel,
        out_shape=jax.ShapeDtypeStruct((rows_pad, lanes), x_nhwc.dtype),
        grid_spec=pltpu.PrefetchScalarGridSpec(
            num_scalar_prefetch=0,
            grid=(rows_pad // tr,),
            in_specs=[pl.BlockSpec((9, tr, lanes), lambda i: (0, i, 0))],
            out_specs=pl.BlockSpec((tr, lanes), lambda i: (i, 0)),
        ),
        compiler_params=pltpu.CompilerParams(
            dimension_semantics=("parallel",),
            vmem_limit_bytes=_vmem_limit_bytes(),
        ),
    )(stacked)
    return out.reshape(-1)[:total].reshape(N, Hout, Wout, C)


# ----------------------------------------------------------------------------
# ResNet-18 definition (SimpleCNN backbone) — parameter init + forward glue
# ----------------------------------------------------------------------------

# (out_channels, per-block strides) for layer1..layer4
STAGES = [(64, [1, 1]), (128, [2, 1]), (256, [2, 1]), (512, [2, 1])]
BN_EPS = 1e-5


def _bn_fold(c):
    gamma = jnp.ones((c,), jnp.float32)
    beta = jnp.zeros((c,), jnp.float32)
    running_mean = jnp.zeros((c,), jnp.float32)
    running_var = jnp.ones((c,), jnp.float32)
    scale = gamma / jnp.sqrt(running_var + BN_EPS)
    bias = beta - running_mean * scale
    return scale, bias


def init_simple_cnn_params(key, num_classes):
    keys = iter(jax.random.split(key, 64))

    def conv_init(o, i, kh, kw):
        fan_in = i * kh * kw
        return (jax.random.normal(next(keys), (o, i, kh, kw), jnp.float32)
                * math.sqrt(2.0 / fan_in))

    params = {}
    s, b = _bn_fold(64)
    params['conv1'] = {'w': conv_init(64, 3, 7, 7), 'scale': s, 'bias': b}

    layers = []
    in_c = 64
    for out_c, strides in STAGES:
        blocks = []
        for stride in strides:
            blk = {}
            blk['conv1_w'] = conv_init(out_c, in_c, 3, 3)
            blk['bn1_scale'], blk['bn1_bias'] = _bn_fold(out_c)
            blk['conv2_w'] = conv_init(out_c, out_c, 3, 3)
            blk['bn2_scale'], blk['bn2_bias'] = _bn_fold(out_c)
            if stride != 1 or in_c != out_c:
                blk['down_w'] = conv_init(out_c, in_c, 1, 1)
                blk['down_scale'], blk['down_bias'] = _bn_fold(out_c)
            blocks.append(blk)
            in_c = out_c
        layers.append(blocks)
    params['layers'] = layers

    bound = 1.0 / math.sqrt(512)  # PyTorch nn.Linear default init
    params['fc'] = {
        'w': jax.random.uniform(next(keys), (512, num_classes), jnp.float32,
                                -bound, bound),
        'bias': jax.random.uniform(next(keys), (num_classes,), jnp.float32,
                                   -bound, bound),
    }
    return params


def basic_block(x, blk, stride):
    identity = x
    out = conv2d_bn_act(x, blk['conv1_w'], blk['bn1_scale'], blk['bn1_bias'],
                        stride=stride, padding=1, apply_relu=True)
    if 'down_w' in blk:
        identity = conv2d_bn_act(x, blk['down_w'], blk['down_scale'],
                                 blk['down_bias'], stride=stride, padding=0,
                                 apply_relu=False)
    # conv2 + bn2 + residual add + final ReLU, all fused in the Pallas epilogue
    out = conv2d_bn_act(out, blk['conv2_w'], blk['bn2_scale'], blk['bn2_bias'],
                        stride=1, padding=1, apply_relu=True,
                        residual_nhwc=identity)
    return out


def simple_cnn_forward(params, x_nchw):
    """Forward pass of SimpleCNN (ResNet-18 backbone, new fc head).

    x_nchw: float32 [N, 3, H, W] (PyTorch NCHW convention).
    returns float32 logits [N, num_classes].
    """
    x = jnp.transpose(x_nchw, (0, 2, 3, 1))  # NCHW -> NHWC
    # stem: conv1 7x7/2 + bn + relu, then maxpool 3x3/2
    x = conv2d_bn_act(x, params['conv1']['w'], params['conv1']['scale'],
                      params['conv1']['bias'], stride=2, padding=3,
                      apply_relu=True)
    x = maxpool_3x3_s2_p1(x)
    # residual stages
    for (out_c, strides), blocks in zip(STAGES, params['layers']):
        for stride, blk in zip(strides, blocks):
            x = basic_block(x, blk, stride)
    # AdaptiveAvgPool2d((1,1)) + fc fused into one matmul:
    #   mean_hw(x) @ W == x.reshape(N, HW*C) @ tile(W, (HW, 1)) / HW
    # (for 32x32 inputs HW == 1, so this is literally reshape + fc).
    Nb, Hf, Wf, Cf = x.shape
    HW = Hf * Wf
    a = x.reshape(Nb, HW * Cf)
    w_fc = jnp.tile(params['fc']['w'], (HW, 1)) / float(HW)
    # TODO(synk): cross-pallas_call weight prefetch for the weight-DMA-bound
    # late layers (P10 futures) is not implemented.
    logits = matmul_fused(a, w_fc, params['fc']['bias'],
                          apply_relu=False, out_dtype=jnp.float32)
    return logits


# ----------------------------------------------------------------------------
# Main
# ----------------------------------------------------------------------------

if __name__ == "__main__":
    num_classes = 10
    key = jax.random.PRNGKey(0)
    pkey, xkey = jax.random.split(key)

    params = init_simple_cnn_params(pkey, num_classes)
    # Small input consistent with ResNet-18's 32x downsampling.
    x = jax.random.normal(xkey, (2, 3, 32, 32), jnp.float32)

    logits = simple_cnn_forward(params, x)
    logits = jax.block_until_ready(logits)

    assert logits.shape == (2, num_classes), logits.shape
    assert logits.dtype == jnp.float32
    assert bool(jnp.all(jnp.isfinite(logits)))
    print("KERNEL_OK")
</pallas_src>

<mosaic_0001>
module attributes {stable_mosaic.version = 11 : i64} {
  func.func @_matmul_fused_k1_kernel(%arg0: i32, %arg1: i32, %arg2: memref<256x256xbf16, #tpu.memory_space<vmem>>, %arg3: memref<256x128xbf16, #tpu.memory_space<vmem>>, %arg4: memref<1x128xf32, #tpu.memory_space<vmem>>, %arg5: memref<256x128xbf16, #tpu.memory_space<vmem>>) attributes {dimension_semantics = [#tpu.dimension_semantics<parallel>, #tpu.dimension_semantics<parallel>], iteration_bounds = array<i64: 2, 1>, scalar_prefetch = 0 : i64, scratch_operands = 0 : i64, tpu.core_type = #tpu.core_type<tc>, window_params = [{transform_indices = @transform_0, window_bounds = array<i64: 256, 256>}, {transform_indices = @transform_1, window_bounds = array<i64: 256, 128>}, {transform_indices = @transform_2, window_bounds = array<i64: 1, 128>}, {transform_indices = @transform_3, window_bounds = array<i64: 256, 128>}]} {
    %c0 = arith.constant 0 : index
    %c0_0 = arith.constant 0 : index
    %0 = vector.load %arg2[%c0, %c0_0] : memref<256x256xbf16, #tpu.memory_space<vmem>>, vector<256x256xbf16>
    %c0_1 = arith.constant 0 : index
    %c0_2 = arith.constant 0 : index
    %1 = vector.load %arg3[%c0_1, %c0_2] : memref<256x128xbf16, #tpu.memory_space<vmem>>, vector<256x128xbf16>
    %cst = arith.constant dense<0.000000e+00> : vector<256x128xf32>
    %2 = tpu.matmul %0, %1, %cst {dimension_numbers = #tpu.dot_dimension_numbers<[1], [0], [0], [1], [0, 0, 1, 1], [], []>} : vector<256x256xbf16>, vector<256x128xbf16>, vector<256x128xf32> -> vector<256x128xf32>
    %c0_3 = arith.constant 0 : index
    %c0_4 = arith.constant 0 : index
    %3 = vector.load %arg4[%c0_3, %c0_4] : memref<1x128xf32, #tpu.memory_space<vmem>>, vector<1x128xf32>
    %4 = vector.broadcast %3 : vector<1x128xf32> to vector<256x128xf32>
    %5 = arith.addf %2, %4 : vector<256x128xf32>
    %cst_5 = arith.constant 0.000000e+00 : f32
    %6 = vector.broadcast %cst_5 : f32 to vector<256x128xf32>
    %7 = arith.maximumf %5, %6 : vector<256x128xf32>
    %8 = arith.truncf %7 : vector<256x128xf32> to vector<256x128xbf16>
    %c0_6 = arith.constant 0 : index
    %c0_7 = arith.constant 0 : index
    %9 = vector.load %arg5[%c0_6, %c0_7] : memref<256x128xbf16, #tpu.memory_space<vmem>>, vector<256x128xbf16>
    tpu.vector_store %arg5[%c0_6, %c0_7], %8 {strides = array<i32>} : memref<256x128xbf16, #tpu.memory_space<vmem>>, vector<256x128xbf16>,
    return
  }
  func.func @transform_0(%arg0: i32, %arg1: i32) -> (i32, i32) {
    %c0_i32 = arith.constant 0 : i32
    %c0_i32_0 = arith.constant 0 : i32
    return %arg0, %c0_i32 : i32, i32
  }
  func.func @transform_1(%arg0: i32, %arg1: i32) -> (i32, i32) {
    %c0_i32 = arith.constant 0 : i32
    %c0_i32_0 = arith.constant 0 : i32
    return %c0_i32, %arg1 : i32, i32
  }
  func.func @transform_2(%arg0: i32, %arg1: i32) -> (i32, i32) {
    %c0_i32 = arith.constant 0 : i32
    %c0_i32_0 = arith.constant 0 : i32
    return %c0_i32, %arg1 : i32, i32
  }
  func.func @transform_3(%arg0: i32, %arg1: i32) -> (i32, i32) {
    %c0_i32 = arith.constant 0 : i32
    return %arg0, %arg1 : i32, i32
  }
}

</mosaic_0001>

<llo_original>
// kernel: tpu_custom_call.1
$region0: #{tpu_custom_call.1}
  #allocation0 [shape = 'u32[]', space=smem, size = 0x4, offset = 0x4, fixed_abs, tag = 'smem constant byte address 0x4 - core index']
  #allocation1 [shape = 'u32[144,128]{1,0:T(1,128)}', space=vmem, size = 0x12000, scoped, tag = 'internal scratch']
  %s0 = inlined_call_operand.hbm [shape: bf16[512,256], index: 0, kind: input, shape index: {}]
  %s1 = inlined_call_operand.hbm [shape: bf16[256,128], index: 1, kind: input, shape index: {}]
  %s2 = inlined_call_operand.vmem [shape: f32[1,128], index: 2, kind: input, shape index: {}]
  %s3 = inlined_call_operand.hbm [shape: bf16[512,128], index: 3, kind: output, shape index: {}]
  %s4 = sld [smem:[#allocation0]]
  $region53: #{tpu_custom_call.1} parent=0
    _
  %s6 = ssub.s32 1, %s4
  %s7 = scalar_select 0, %s6, %s4
  $region1: #{tpu_custom_call.1} parent=0
    #allocation2 [shape = 'u8[262144]{0}', space=vmem, size = 0x40000, scoped, tag = 'input window, operand 0']
    #allocation3 [shape = 's32[2]{0}', space=sflag, size = 0x8, scoped, tag = 'scoped memory for tpu_custom_call.1']
    #allocation4 [shape = 's32[2]{0}', space=sflag, size = 0x8, scoped, tag = 'scoped memory for tpu_custom_call.1']
    #allocation5 [shape = 'u8[65536]{0}', space=vmem, size = 0x10000, scoped, tag = 'input window, operand 1, single buffered']
    #allocation6 [shape = 's32[1]{0}', space=sflag, size = 0x4, scoped, tag = 'scoped memory for tpu_custom_call.1']
    #allocation7 [shape = 'u8[131072]{0}', space=vmem, size = 0x20000, scoped, tag = 'output window, operand 0']
    %8 = vsyncpa [#allocation3], 0
    %s9 = scalar_lea.sflag [#allocation3], 1
    %10 = vsyncpa %s9, 0
    %11 = vsyncpa [#allocation6], 0
    %12 = vsyncpa [#allocation4], 0
    %s13 = scalar_lea.sflag [#allocation4], 1
    %14 = vsyncpa %s13, 0
    loop: start=0, step=1, limit=4
    $region2: #{tpu_custom_call.1} parent=1 // loop_pre_header
      _
    $region3: #{tpu_custom_call.1} parent=1 // loop_header
      %s16 = sphi 0, %s20
      %p17 = scmp.ge.s32.totalorder %s16, 4
      %s23 = sphi 0, %s35
      %s24 = sphi 0, %s31
      %s25 = sphi 0, %s23
      %s26 = sphi 0, %s24
      %s27 = sphi 0, %s25
      %s28 = sphi 0, %s26
      %s38 = sphi 0, %s40
      %s41 = sphi 0, %s38
      %s42 = sphi 0, %s41
      %s58 = sphi 0, %s42
      %s64 = sphi 0, %s66
      %s67 = sphi 0, %s64
      %s68 = sphi 0, %s67
      %s84 = sphi 0, %s68
      %s90 = sphi 0, %s92
      %s93 = sphi 0, %s90
      %s94 = sphi 0, %s93
      %s110 = sphi 0, %s94
      %s118 = sphi 0, %s120
      %s121 = sphi 0, %s118
      %s122 = sphi 0, %s121
      %s138 = sphi 0, %s122
    $region4: #{tpu_custom_call.1} parent=1 // loop_header_branch
      %19 = sbr.rel (%p17) target = $region8
    $region5: #{tpu_custom_call.1} parent=1 // loop_body
      %s21 = ssub.s32 %s16, 1
      %s22 = ssub.s32 %s16, 2
      %s29 = sadd.s32 1, %s24
      %p30 = scmp.ge.s32.totalorder %s29, 1
      %s31 = scalar_select %p30, 0, %s29
      %s32 = sadd.s32 1, %s23
      %s33 = scalar_select %p30, %s32, %s23
      %p34 = scmp.ge.s32.totalorder %s33, 2
      %s35 = scalar_select %p34, 0, %s33
      %s36 = ssub.s32 %s23, %s35
      %p37 = scmp.eq.s32.totalorder %s36, 0
      %s39 = sadd.s32 %s38, 1
      %s40 = scalar_select %p37, %s38, %s39
      %p43 = pneg %p37
      %p44 = scmp.eq.s32.totalorder %s16, 1
      %p45 = por %p43, %p44
      %p46 = scmp.ne.s32.totalorder %s38, %s41
      %p47 = scmp.eq.s32.totalorder %s16, 0
      %p48 = por %p46, %p47
      %p49 = scmp.ne.s32.totalorder %s38, %s41
      %p50 = scmp.eq.s32.totalorder %s21, 1
      %p51 = por %p49, %p50
      %p52 = scmp.ne.s32.totalorder %s41, %s42
      %p53 = scmp.eq.s32.totalorder %s21, 0
      %p54 = por %p52, %p53
      %p55 = scmp.ne.s32.totalorder %s41, %s42
      %p56 = scmp.eq.s32.totalorder %s22, 1
      %p57 = por %p55, %p56
      %p59 = scmp.ne.s32.totalorder %s42, %s58
      %p60 = scmp.eq.s32.totalorder %s22, 0
      %p61 = por %p59, %p60
      %s62 = ssub.s32 %s24, %s31
      %p63 = scmp.eq.s32.totalorder %s62, 0
      %s65 = sadd.s32 %s64, 1
      %s66 = scalar_select %p63, %s64, %s65
      %p69 = pneg %p63
      %p70 = scmp.eq.s32.totalorder %s16, 1
      %p71 = por %p69, %p70
      %p72 = scmp.ne.s32.totalorder %s64, %s67
      %p73 = scmp.eq.s32.totalorder %s16, 0
      %p74 = por %p72, %p73
      %p75 = scmp.ne.s32.totalorder %s64, %s67
      %p76 = scmp.eq.s32.totalorder %s21, 1
      %p77 = por %p75, %p76
      %p78 = scmp.ne.s32.totalorder %s67, %s68
      %p79 = scmp.eq.s32.totalorder %s21, 0
      %p80 = por %p78, %p79
      %p81 = scmp.ne.s32.totalorder %s67, %s68
      %p82 = scmp.eq.s32.totalorder %s22, 1
      %p83 = por %p81, %p82
      %p85 = scmp.ne.s32.totalorder %s68, %s84
      %p86 = scmp.eq.s32.totalorder %s22, 0
      %p87 = por %p85, %p86
      %s88 = ssub.s32 %s24, %s31
      %p89 = scmp.eq.s32.totalorder %s88, 0
      %s91 = sadd.s32 %s90, 1
      %s92 = scalar_select %p89, %s90, %s91
      %p95 = pneg %p89
      %p96 = scmp.eq.s32.totalorder %s16, 1
      %p97 = por %p95, %p96
      %p98 = scmp.ne.s32.totalorder %s90, %s93
      %p99 = scmp.eq.s32.totalorder %s16, 0
      %p100 = por %p98, %p99
      %p101 = scmp.ne.s32.totalorder %s90, %s93
      %p102 = scmp.eq.s32.totalorder %s21, 1
      %p103 = por %p101, %p102
      %p104 = scmp.ne.s32.totalorder %s93, %s94
      %p105 = scmp.eq.s32.totalorder %s21, 0
      %p106 = por %p104, %p105
      %p107 = scmp.ne.s32.totalorder %s93, %s94
      %p108 = scmp.eq.s32.totalorder %s22, 1
      %p109 = por %p107, %p108
      %p111 = scmp.ne.s32.totalorder %s94, %s110
      %p112 = scmp.eq.s32.totalorder %s22, 0
      %p113 = por %p111, %p112
      %s114 = ssub.s32 %s23, %s35
      %s115 = ssub.s32 %s24, %s31
      %s116 = sor.u32 %s114, %s115
      %p117 = scmp.eq.s32.totalorder %s116, 0
      %s119 = sadd.s32 %s118, 1
      %s120 = scalar_select %p117, %s118, %s119
      %p123 = pneg %p117
      %p124 = scmp.eq.s32.totalorder %s16, 1
      %p125 = por %p123, %p124
      %p126 = scmp.ne.s32.totalorder %s118, %s121
      %p127 = scmp.eq.s32.totalorder %s16, 0
      %p128 = por %p126, %p127
      %p129 = scmp.ne.s32.totalorder %s118, %s121
      %p130 = scmp.eq.s32.totalorder %s21, 1
      %p131 = por %p129, %p130
      %p132 = scmp.ne.s32.totalorder %s121, %s122
      %p133 = scmp.eq.s32.totalorder %s21, 0
      %p134 = por %p132, %p133
      %p135 = scmp.ne.s32.totalorder %s121, %s122
      %p136 = scmp.eq.s32.totalorder %s22, 1
      %p137 = por %p135, %p136
      %p139 = scmp.ne.s32.totalorder %s122, %s138
      %p140 = scmp.eq.s32.totalorder %s22, 0
      %p141 = por %p139, %p140
      %p142 = scmp.le.s32.totalorder 1, %s16
      %p143 = scmp.lt.s32.totalorder %s16, 3
      %p144 = pnand %p142, %p143
      %p145 = pneg %p144
      // Predicated region
      $region9: #{tpu_custom_call.1} parent=5 // pred_check
        _
      $region10: #{tpu_custom_call.1} parent=5 // pred_check_branch
        %147 = sbr.rel (%p144) target = $region12
      $region11: #{tpu_custom_call.1} parent=5 // pred_region
        %s148 = ssub.s32 %s16, 1
        // Predicated region
        $region13: #{tpu_custom_call.1} parent=11 // pred_check
          %p149 = pneg %p80
        $region14: #{tpu_custom_call.1} parent=11 // pred_check_branch
          %151 = sbr.rel (%p149) target = $region16
        $region15: #{tpu_custom_call.1} parent=11 // pred_region
          %s153 = ssub.s32 2048, 2048
          %154 = vsyncadd [#allocation6], %s153
          %s155 = smul.addr %s26, 64
          %s156 = scalar_lea.hbm %s1, %s155
          %s157 = sshll.u32 [#allocation5], 4
          %s158 = int_to_ptr.vmem [resolvable:$true] %s157
          %163 = dma.hbm_to_vmem [thread:$0]  %s156, 2048, %s158, [#allocation6], 64, 64, 4
        $region16: #{tpu_custom_call.1} parent=11 // pred_fallthru
          _
        // Predicated region
        $region17: #{tpu_custom_call.1} parent=11 // pred_check
          %p164 = pneg %p106
        $region18: #{tpu_custom_call.1} parent=11 // pred_check_branch
          %166 = sbr.rel (%p164) target = $region20
        $region19: #{tpu_custom_call.1} parent=11 // pred_region
          %p167 = scmp.lt.s32.totalorder %s26, 0
          %s168 = scalar_select %p167, %s26, 0
          %s169 = scalar_lea.vmem %s2, %s168
        $region20: #{tpu_custom_call.1} parent=11 // pred_fallthru
          _
      $region12: #{tpu_custom_call.1} parent=5 // pred_fallthru
        _
      %p170 = scmp.lt.s32.totalorder %s16, 2
      // Predicated region
      $region21: #{tpu_custom_call.1} parent=5 // pred_check
        %p171 = pneg %p170
      $region22: #{tpu_custom_call.1} parent=5 // pred_check_branch
        %173 = sbr.rel (%p171) target = $region24
      $region23: #{tpu_custom_call.1} parent=5 // pred_region
        // Predicated region
        $region25: #{tpu_custom_call.1} parent=23 // pred_check
          %p174 = pneg %p48
        $region26: #{tpu_custom_call.1} parent=23 // pred_check_branch
          %176 = sbr.rel (%p174) target = $region28
        $region27: #{tpu_custom_call.1} parent=23 // pred_region
          %s177 = sand.u32 %s38, 1
          %s178 = scalar_lea.sflag [#allocation3], %s177
          %s179 = sand.u32 %s38, 1
          %s180 = smul.addr %s179, 256
          %s181 = scalar_lea.vmem [#allocation2], %s180
          %s182 = smul.u32 32, %s23
          %s184 = ssub.s32 4096, 4096
          %185 = vsyncadd %s178, %s184
          %s186 = smul.addr %s182, 2
          %s187 = smul.addr %s186, 64
          %s188 = scalar_lea.hbm %s0, %s187
          %s189 = sshll.u32 %s181, 4
          %s190 = int_to_ptr.vmem [resolvable:$true] %s189
          %195 = dma.hbm_to_vmem [thread:$0]  %s188, 4096, %s190, %s178, 128, 128, 8
        $region28: #{tpu_custom_call.1} parent=23 // pred_fallthru
          _
      $region24: #{tpu_custom_call.1} parent=5 // pred_fallthru
        _
      %p196 = scmp.le.s32.totalorder 1, %s16
      %p197 = scmp.lt.s32.totalorder %s16, 3
      %p198 = pnand %p196, %p197
      %p199 = pneg %p198
      // Predicated region
      $region29: #{tpu_custom_call.1} parent=5 // pred_check
        _
      $region30: #{tpu_custom_call.1} parent=5 // pred_check_branch
        %201 = sbr.rel (%p198) target = $region32
      $region31: #{tpu_custom_call.1} parent=5 // pred_region
        %s202 = ssub.s32 %s16, 1
        %s203 = sand.u32 %s41, 1
        %s204 = scalar_lea.sflag [#allocation3], %s203
        %s205 = sand.u32 %s41, 1
        %s206 = smul.addr %s205, 256
        %s207 = scalar_lea.vmem [#allocation2], %s206
        // Predicated region
        $region33: #{tpu_custom_call.1} parent=31 // pred_check
          %p208 = pneg %p54
        $region34: #{tpu_custom_call.1} parent=31 // pred_check_branch
          %210 = sbr.rel (%p208) target = $region36
        $region35: #{tpu_custom_call.1} parent=31 // pred_region
          %211 = dma.done %s204, 4096
        $region36: #{tpu_custom_call.1} parent=31 // pred_fallthru
          _
        // Predicated region
        $region37: #{tpu_custom_call.1} parent=31 // pred_check
          %p212 = pneg %p80
        $region38: #{tpu_custom_call.1} parent=31 // pred_check_branch
          %214 = sbr.rel (%p212) target = $region40
        $region39: #{tpu_custom_call.1} parent=31 // pred_region
          %215 = dma.done [#allocation6], 2048
        $region40: #{tpu_custom_call.1} parent=31 // pred_fallthru
          _
        %s216 = sand.u32 %s41, 1
        %s217 = scalar_lea.sflag [#allocation3], %s216
        %s218 = sand.u32 %s41, 1
        %s219 = smul.addr %s218, 256
        %s220 = scalar_lea.vmem [#allocation2], %s219
        %p221 = pneg %p54
        %p222 = pneg %p51
        %p223 = pneg %p80
        %p224 = pneg %p77
        %p225 = scmp.lt.s32.totalorder %s26, 0
        %s226 = scalar_select %p225, %s26, 0
        %s227 = scalar_lea.vmem %s2, %s226
        %p228 = pneg %p106
        %p229 = pneg %p103
        %p230 = pneg %p134
        %p231 = pneg %p131
        %s232 = sand.u32 %s121, 1
        %s233 = scalar_lea.sflag [#allocation4], %s232
        %s234 = sand.u32 %s121, 1
        %s235 = smul.addr %s234, 128
        %s236 = scalar_lea.vmem [#allocation7], %s235
        %s237 = smul.u32 32, %s25
        %p238 = scmp.lt.s32.totalorder %s26, 0
        %s239 = scalar_select %p238, %s26, 0
        %s240 = scalar_lea.vmem %s2, %s239
        %s241 = smul.u32 32, %s25
        %v243 = vld [vmem:[%s207] sm:$0xff]
        %v244 = vld [vmem:[%s207 + $0x8] sm:$0xff]
        %v245 = vld [vmem:[%s207 + $0x10] sm:$0xff]
        %v246 = vld [vmem:[%s207 + $0x18] sm:$0xff]
        %v247 = vld [vmem:[%s207 + $0x20] sm:$0xff]
        %v248 = vld [vmem:[%s207 + $0x28] sm:$0xff]
        %v249 = vld [vmem:[%s207 + $0x30] sm:$0xff]
        %v250 = vld [vmem:[%s207 + $0x38] sm:$0xff]
        %v251 = vld [vmem:[%s207 + $0x40] sm:$0xff]
        %v252 = vld [vmem:[%s207 + $0x48] sm:$0xff]
        %v253 = vld [vmem:[%s207 + $0x50] sm:$0xff]
        %v254 = vld [vmem:[%s207 + $0x58] sm:$0xff]
        %v255 = vld [vmem:[%s207 + $0x60] sm:$0xff]
        %v256 = vld [vmem:[%s207 + $0x68] sm:$0xff]
        %v257 = vld [vmem:[%s207 + $0x70] sm:$0xff]
        %v258 = vld [vmem:[%s207 + $0x78] sm:$0xff]
        %v259 = vld [vmem:[%s207 + $0x80] sm:$0xff]
        %v260 = vld [vmem:[%s207 + $0x88] sm:$0xff]
        %v261 = vld [vmem:[%s207 + $0x90] sm:$0xff]
        %v262 = vld [vmem:[%s207 + $0x98] sm:$0xff]
        %v263 = vld [vmem:[%s207 + $0xa0] sm:$0xff]
        %v264 = vld [vmem:[%s207 + $0xa8] sm:$0xff]
        %v265 = vld [vmem:[%s207 + $0xb0] sm:$0xff]
        %v266 = vld [vmem:[%s207 + $0xb8] sm:$0xff]
        %v267 = vld [vmem:[%s207 + $0xc0] sm:$0xff]
        %v268 = vld [vmem:[%s207 + $0xc8] sm:$0xff]
        %v269 = vld [vmem:[%s207 + $0xd0] sm:$0xff]
        %v270 = vld [vmem:[%s207 + $0xd8] sm:$0xff]
        %v271 = vld [vmem:[%s207 + $0xe0] sm:$0xff]
        %v272 = vld [vmem:[%s207 + $0xe8] sm:$0xff]
        %v273 = vld [vmem:[%s207 + $0xf0] sm:$0xff]
        %v274 = vld [vmem:[%s207 + $0xf8] sm:$0xff]
        %v275 = vld [vmem:[#allocation5] sm:$0xf]
        %v276 = vld [vmem:[#allocation5 + $0x4] sm:$0xf]
        %v277 = vld [vmem:[#allocation5 + $0x8] sm:$0xf]
        %v278 = vld [vmem:[#allocation5 + $0xc] sm:$0xf]
        %v279 = vld [vmem:[#allocation5 + $0x10] sm:$0xf]
        %v280 = vld [vmem:[#allocation5 + $0x14] sm:$0xf]
        %v281 = vld [vmem:[#allocation5 + $0x18] sm:$0xf]
        %v282 = vld [vmem:[#allocation5 + $0x1c] sm:$0xf]
        %v283 = vld [vmem:[#allocation5 + $0x20] sm:$0xf]
        %v284 = vld [vmem:[#allocation5 + $0x24] sm:$0xf]
        %v285 = vld [vmem:[#allocation5 + $0x28] sm:$0xf]
        %v286 = vld [vmem:[#allocation5 + $0x2c] sm:$0xf]
        %v287 = vld [vmem:[#allocation5 + $0x30] sm:$0xf]
        %v288 = vld [vmem:[#allocation5 + $0x34] sm:$0xf]
        %v289 = vld [vmem:[#allocation5 + $0x38] sm:$0xf]
        %v290 = vld [vmem:[#allocation5 + $0x3c] sm:$0xf]
        %v291 = vld [vmem:[#allocation5 + $0x40] sm:$0xf]
        %v292 = vld [vmem:[#allocation5 + $0x44] sm:$0xf]
        %v293 = vld [vmem:[#allocation5 + $0x48] sm:$0xf]
        %v294 = vld [vmem:[#allocation5 + $0x4c] sm:$0xf]
        %v295 = vld [vmem:[#allocation5 + $0x50] sm:$0xf]
        %v296 = vld [vmem:[#allocation5 + $0x54] sm:$0xf]
        %v297 = vld [vmem:[#allocation5 + $0x58] sm:$0xf]
        %v298 = vld [vmem:[#allocation5 + $0x5c] sm:$0xf]
        %v299 = vld [vmem:[#allocation5 + $0x60] sm:$0xf]
        %v300 = vld [vmem:[#allocation5 + $0x64] sm:$0xf]
        %v301 = vld [vmem:[#allocation5 + $0x68] sm:$0xf]
        %v302 = vld [vmem:[#allocation5 + $0x6c] sm:$0xf]
        %v303 = vld [vmem:[#allocation5 + $0x70] sm:$0xf]
        %v304 = vld [vmem:[#allocation5 + $0x74] sm:$0xf]
        %v305 = vld [vmem:[#allocation5 + $0x78] sm:$0xf]
        %v306 = vld [vmem:[#allocation5 + $0x7c] sm:$0xf]
        %v307 = vld [vmem:[%s240] sm:$0x1]
        %v309 = vlaneseq
        %v310 = vshrl.u32 %v309, 7
        %v311 = vsub.s32 0, %v310
        %v312 = vrot.slane %v307, %v311
        %v346 = vunpack.c.l.b16 %v243
        %v347 = vunpack.c.h.b16 %v243
        %v348 = vunpack.c.l.b16 %v244
        %v349 = vunpack.c.h.b16 %v244
        %v350 = vunpack.c.l.b16 %v245
        %v351 = vunpack.c.h.b16 %v245
        %v352 = vunpack.c.l.b16 %v246
        %v353 = vunpack.c.h.b16 %v246
        %v354 = vunpack.c.l.b16 %v247
        %v355 = vunpack.c.h.b16 %v247
        %v356 = vunpack.c.l.b16 %v248
        %v357 = vunpack.c.h.b16 %v248
        %v358 = vunpack.c.l.b16 %v249
        %v359 = vunpack.c.h.b16 %v249
        %v360 = vunpack.c.l.b16 %v250
        %v361 = vunpack.c.h.b16 %v250
        %v362 = vunpack.c.l.b16 %v251
        %v363 = vunpack.c.h.b16 %v251
        %v364 = vunpack.c.l.b16 %v252
        %v365 = vunpack.c.h.b16 %v252
        %v366 = vunpack.c.l.b16 %v253
        %v367 = vunpack.c.h.b16 %v253
        %v368 = vunpack.c.l.b16 %v254
        %v369 = vunpack.c.h.b16 %v254
        %v370 = vunpack.c.l.b16 %v255
        %v371 = vunpack.c.h.b16 %v255
        %v372 = vunpack.c.l.b16 %v256
        %v373 = vunpack.c.h.b16 %v256
        %v374 = vunpack.c.l.b16 %v257
        %v375 = vunpack.c.h.b16 %v257
        %v376 = vunpack.c.l.b16 %v258
        %v377 = vunpack.c.h.b16 %v258
        %v378 = vunpack.c.l.b16 %v259
        %v379 = vunpack.c.h.b16 %v259
        %v380 = vunpack.c.l.b16 %v260
        %v381 = vunpack.c.h.b16 %v260
        %v382 = vunpack.c.l.b16 %v261
        %v383 = vunpack.c.h.b16 %v261
        %v384 = vunpack.c.l.b16 %v262
        %v385 = vunpack.c.h.b16 %v262
        %v386 = vunpack.c.l.b16 %v263
        %v387 = vunpack.c.h.b16 %v263
        %v388 = vunpack.c.l.b16 %v264
        %v389 = vunpack.c.h.b16 %v264
        %v390 = vunpack.c.l.b16 %v265
        %v391 = vunpack.c.h.b16 %v265
        %v392 = vunpack.c.l.b16 %v266
        %v393 = vunpack.c.h.b16 %v266
        %v394 = vunpack.c.l.b16 %v267
        %v395 = vunpack.c.h.b16 %v267
        %v396 = vunpack.c.l.b16 %v268
        %v397 = vunpack.c.h.b16 %v268
        %v398 = vunpack.c.l.b16 %v269
        %v399 = vunpack.c.h.b16 %v269
        %v400 = vunpack.c.l.b16 %v270
        %v401 = vunpack.c.h.b16 %v270
        %v402 = vunpack.c.l.b16 %v271
        %v403 = vunpack.c.h.b16 %v271
        %v404 = vunpack.c.l.b16 %v272
        %v405 = vunpack.c.h.b16 %v272
        %v406 = vunpack.c.l.b16 %v273
        %v407 = vunpack.c.h.b16 %v273
        %v408 = vunpack.c.l.b16 %v274
        %v409 = vunpack.c.h.b16 %v274
        %v410 = vpack.c.b16 %v348, %v346
        %v411 = vpack.c.b16 %v349, %v347
        %v412 = vpack.c.b16 %v352, %v350
        %v413 = vpack.c.b16 %v353, %v351
        %v414 = vpack.c.b16 %v356, %v354
        %v415 = vpack.c.b16 %v357, %v355
        %v416 = vpack.c.b16 %v360, %v358
        %v417 = vpack.c.b16 %v361, %v359
        %v418 = vpack.c.b16 %v364, %v362
        %v419 = vpack.c.b16 %v365, %v363
        %v420 = vpack.c.b16 %v368, %v366
        %v421 = vpack.c.b16 %v369, %v367
        %v422 = vpack.c.b16 %v372, %v370
        %v423 = vpack.c.b16 %v373, %v371
        %v424 = vpack.c.b16 %v376, %v374
        %v425 = vpack.c.b16 %v377, %v375
        %v426 = vpack.c.b16 %v380, %v378
        %v427 = vpack.c.b16 %v381, %v379
        %v428 = vpack.c.b16 %v384, %v382
        %v429 = vpack.c.b16 %v385, %v383
        %v430 = vpack.c.b16 %v388, %v386
        %v431 = vpack.c.b16 %v389, %v387
        %v432 = vpack.c.b16 %v392, %v390
        %v433 = vpack.c.b16 %v393, %v391
        %v434 = vpack.c.b16 %v396, %v394
        %v435 = vpack.c.b16 %v397, %v395
        %v436 = vpack.c.b16 %v400, %v398
        %v437 = vpack.c.b16 %v401, %v399
        %v438 = vpack.c.b16 %v404, %v402
        %v439 = vpack.c.b16 %v405, %v403
        %v440 = vpack.c.b16 %v408, %v406
        %v441 = vpack.c.b16 %v409, %v407
        %v506 = vunpack.c.l.b16 %v275
        %v507 = vunpack.c.l.b16 %v276
        %v508 = vunpack.c.l.b16 %v277
        %v509 = vunpack.c.l.b16 %v278
        %v510 = vunpack.c.l.b16 %v279
        %v511 = vunpack.c.l.b16 %v280
        %v512 = vunpack.c.l.b16 %v281
        %v513 = vunpack.c.l.b16 %v282
        %v514 = vunpack.c.l.b16 %v283
        %v515 = vunpack.c.l.b16 %v284
        %v516 = vunpack.c.l.b16 %v285
        %v517 = vunpack.c.l.b16 %v286
        %v518 = vunpack.c.l.b16 %v287
        %v519 = vunpack.c.l.b16 %v288
        %v520 = vunpack.c.l.b16 %v289
        %v521 = vunpack.c.l.b16 %v290
        %v522 = vunpack.c.l.b16 %v291
        %v523 = vunpack.c.l.b16 %v292
        %v524 = vunpack.c.l.b16 %v293
        %v525 = vunpack.c.l.b16 %v294
        %v526 = vunpack.c.l.b16 %v295
        %v527 = vunpack.c.l.b16 %v296
        %v528 = vunpack.c.l.b16 %v297
        %v529 = vunpack.c.l.b16 %v298
        %v530 = vunpack.c.l.b16 %v299
        %v531 = vunpack.c.l.b16 %v300
        %v532 = vunpack.c.l.b16 %v301
        %v533 = vunpack.c.l.b16 %v302
        %v534 = vunpack.c.l.b16 %v303
        %v535 = vunpack.c.l.b16 %v304
        %v536 = vunpack.c.l.b16 %v305
        %v537 = vunpack.c.l.b16 %v306
        %v538 = vpack.c.b16 %v507, %v506
        %v539 = vpack.c.b16 %v509, %v508
        %v540 = vpack.c.b16 %v511, %v510
        %v541 = vpack.c.b16 %v513, %v512
        %v542 = vpack.c.b16 %v515, %v514
        %v543 = vpack.c.b16 %v517, %v516
        %v544 = vpack.c.b16 %v519, %v518
        %v545 = vpack.c.b16 %v521, %v520
        %v546 = vpack.c.b16 %v523, %v522
        %v547 = vpack.c.b16 %v525, %v524
        %v548 = vpack.c.b16 %v527, %v526
        %v549 = vpack.c.b16 %v529, %v528
        %v550 = vpack.c.b16 %v531, %v530
        %v551 = vpack.c.b16 %v533, %v532
        %v552 = vpack.c.b16 %v535, %v534
        %v553 = vpack.c.b16 %v537, %v536
        %570 = vmatprep.subr.bf16.mxu0 0
        %571 = vmatpush1.bf16.msra.mxu0 %v545
        %572 = vmatprep.subr.bf16.mxu0 0
        %573 = vmatpush1.bf16.msra.mxu0 %v544
        %574 = vmatprep.subr.bf16.mxu0 0
        %575 = vmatpush1.bf16.msra.mxu0 %v543
        %576 = vmatprep.subr.bf16.mxu0 0
        %577 = vmatpush1.bf16.msra.mxu0 %v542
        %578 = vmatprep.subr.bf16.mxu0 0
        %579 = vmatpush1.bf16.msra.mxu0 %v541
        %580 = vmatprep.subr.bf16.mxu0 0
        %581 = vmatpush1.bf16.msra.mxu0 %v540
        %582 = vmatprep.subr.bf16.mxu0 0
        %583 = vmatpush1.bf16.msra.mxu0 %v539
        %584 = vmatprep.subr.bf16.mxu0 0
        %585 = vmatpush1.bf16.msra.mxu0 %v538
        %586 = vmatprep.subr.bf16.mxu0 0
        %587 = vmatpush2.bf16.msra.mxu0 %v553
        %588 = vmatprep.subr.bf16.mxu0 0
        %589 = vmatpush2.bf16.msra.mxu0 %v552
        %590 = vmatprep.subr.bf16.mxu0 0
        %591 = vmatpush2.bf16.msra.mxu0 %v551
        %592 = vmatprep.subr.bf16.mxu0 0
        %593 = vmatpush2.bf16.msra.mxu0 %v550
        %594 = vmatprep.subr.bf16.mxu0 0
        %595 = vmatpush2.bf16.msra.mxu0 %v549
        %596 = vmatprep.subr.bf16.mxu0 0
        %597 = vmatpush2.bf16.msra.mxu0 %v548
        %598 = vmatprep.subr.bf16.mxu0 0
        %599 = vmatpush2.bf16.msra.mxu0 %v547
        %600 = vmatprep.subr.bf16.mxu0 0
        %601 = vmatpush2.bf16.msra.mxu0 %v546
        %602 = vmatprep.mubr.bf16.mxu0 %v411
        %603 = vmatmul.mubr.bf16.gmra.mxu0 %v410
        %v604 = vpop.f32.mrf.mxu0
        %v605 = vadd.f32 %v312, %v604
        %v606 = vpop.f32.mrf.mxu0
        %v607 = vpop.f32.mrf.mxu0
        %v608 = vadd.f32 %v312, %v607
        %v609 = vpop.f32.mrf.mxu0
        %610 = vmatprep.mubr.bf16.mxu0 %v413
        %611 = vmatmul.mubr.bf16.gmra.mxu0 %v412
        %v612 = vpop.f32.mrf.mxu0
        %v613 = vadd.f32 %v312, %v612
        %v614 = vpop.f32.mrf.mxu0
        %v615 = vpop.f32.mrf.mxu0
        %v616 = vadd.f32 %v312, %v615
        %v617 = vpop.f32.mrf.mxu0
        %618 = vmatprep.mubr.bf16.mxu0 %v415
        %619 = vmatmul.mubr.bf16.gmra.mxu0 %v414
        %v620 = vpop.f32.mrf.mxu0
        %v621 = vadd.f32 %v312, %v620
        %v622 = vpop.f32.mrf.mxu0
        %v623 = vpop.f32.mrf.mxu0
        %v624 = vadd.f32 %v312, %v623
        %v625 = vpop.f32.mrf.mxu0
        %626 = vmatprep.mubr.bf16.mxu0 %v417
        %627 = vmatmul.mubr.bf16.gmra.mxu0 %v416
        %v628 = vpop.f32.mrf.mxu0
        %v629 = vadd.f32 %v312, %v628
        %v630 = vpop.f32.mrf.mxu0
        %v631 = vpop.f32.mrf.mxu0
        %v632 = vadd.f32 %v312, %v631
        %v633 = vpop.f32.mrf.mxu0
        %634 = vmatprep.mubr.bf16.mxu0 %v419
        %635 = vmatmul.mubr.bf16.gmra.mxu0 %v418
        %v636 = vpop.f32.mrf.mxu0
        %v637 = vadd.f32 %v312, %v636
        %v638 = vpop.f32.mrf.mxu0
        %v639 = vpop.f32.mrf.mxu0
        %v640 = vadd.f32 %v312, %v639
        %v641 = vpop.f32.mrf.mxu0
        %642 = vmatprep.mubr.bf16.mxu0 %v421
        %643 = vmatmul.mubr.bf16.gmra.mxu0 %v420
        %v644 = vpop.f32.mrf.mxu0
        %v645 = vadd.f32 %v312, %v644
        %v646 = vpop.f32.mrf.mxu0
        %v647 = vpop.f32.mrf.mxu0
        %v648 = vadd.f32 %v312, %v647
        %v649 = vpop.f32.mrf.mxu0
        %650 = vmatprep.mubr.bf16.mxu0 %v423
        %651 = vmatmul.mubr.bf16.gmra.mxu0 %v422
        %v652 = vpop.f32.mrf.mxu0
        %v653 = vadd.f32 %v312, %v652
        %v654 = vpop.f32.mrf.mxu0
        %v655 = vpop.f32.mrf.mxu0
        %v656 = vadd.f32 %v312, %v655
        %v657 = vpop.f32.mrf.mxu0
        %658 = vmatprep.mubr.bf16.mxu0 %v425
        %659 = vmatmul.mubr.bf16.gmra.mxu0 %v424
        %v660 = vpop.f32.mrf.mxu0
        %v661 = vadd.f32 %v312, %v660
        %v662 = vpop.f32.mrf.mxu0
        %v663 = vpop.f32.mrf.mxu0
        %v664 = vadd.f32 %v312, %v663
        %v665 = vpop.f32.mrf.mxu0
        %666 = vmatprep.mubr.bf16.mxu0 %v427
        %667 = vmatmul.mubr.bf16.gmra.mxu0 %v426
        %v668 = vpop.f32.mrf.mxu0
        %v669 = vadd.f32 %v312, %v668
        %v670 = vpop.f32.mrf.mxu0
        %v671 = vpop.f32.mrf.mxu0
        %v672 = vadd.f32 %v312, %v671
        %v673 = vpop.f32.mrf.mxu0
        %674 = vmatprep.mubr.bf16.mxu0 %v429
        %675 = vmatmul.mubr.bf16.gmra.mxu0 %v428
        %v676 = vpop.f32.mrf.mxu0
        %v677 = vadd.f32 %v312, %v676
        %v678 = vpop.f32.mrf.mxu0
        %v679 = vpop.f32.mrf.mxu0
        %v680 = vadd.f32 %v312, %v679
        %v681 = vpop.f32.mrf.mxu0
        %682 = vmatprep.mubr.bf16.mxu0 %v431
        %683 = vmatmul.mubr.bf16.gmra.mxu0 %v430
        %v684 = vpop.f32.mrf.mxu0
        %v685 = vadd.f32 %v312, %v684
        %v686 = vpop.f32.mrf.mxu0
        %v687 = vpop.f32.mrf.mxu0
        %v688 = vadd.f32 %v312, %v687
        %v689 = vpop.f32.mrf.mxu0
        %690 = vmatprep.mubr.bf16.mxu0 %v433
        %691 = vmatmul.mubr.bf16.gmra.mxu0 %v432
        %v692 = vpop.f32.mrf.mxu0
        %v693 = vadd.f32 %v312, %v692
        %v694 = vpop.f32.mrf.mxu0
        %v695 = vpop.f32.mrf.mxu0
        %v696 = vadd.f32 %v312, %v695
        %v697 = vpop.f32.mrf.mxu0
        %698 = vmatprep.mubr.bf16.mxu0 %v435
        %699 = vmatmul.mubr.bf16.gmra.mxu0 %v434
        %v700 = vpop.f32.mrf.mxu0
        %v701 = vadd.f32 %v312, %v700
        %v702 = vpop.f32.mrf.mxu0
        %v703 = vpop.f32.mrf.mxu0
        %v704 = vadd.f32 %v312, %v703
        %v705 = vpop.f32.mrf.mxu0
        %706 = vmatprep.mubr.bf16.mxu0 %v437
        %707 = vmatmul.mubr.bf16.gmra.mxu0 %v436
        %v708 = vpop.f32.mrf.mxu0
        %v709 = vadd.f32 %v312, %v708
        %v710 = vpop.f32.mrf.mxu0
        %v711 = vpop.f32.mrf.mxu0
        %v712 = vadd.f32 %v312, %v711
        %v713 = vpop.f32.mrf.mxu0
        %714 = vmatprep.mubr.bf16.mxu0 %v439
        %715 = vmatmul.mubr.bf16.gmra.mxu0 %v438
        %v716 = vpop.f32.mrf.mxu0
        %v717 = vadd.f32 %v312, %v716
        %v718 = vpop.f32.mrf.mxu0
        %v719 = vpop.f32.mrf.mxu0
        %v720 = vadd.f32 %v312, %v719
        %v721 = vpop.f32.mrf.mxu0
        %722 = vmatprep.mubr.bf16.mxu0 %v441
        %723 = vmatmul.mubr.bf16.gmra.mxu0 %v440
        %v724 = vpop.f32.mrf.mxu0
        %v725 = vadd.f32 %v312, %v724
        %v726 = vpop.f32.mrf.mxu0
        %v727 = vpop.f32.mrf.mxu0
        %v728 = vadd.f32 %v312, %v727
        %v729 = vpop.f32.mrf.mxu0
        %730 = vdwg.mxu0
        %v731 = vmax.f32 %v605, 0.0
        %v732 = vmax.f32 %v608, 0.0
        %v733 = vmax.f32 %v613, 0.0
        %v734 = vmax.f32 %v616, 0.0
        %v735 = vmax.f32 %v621, 0.0
        %v736 = vmax.f32 %v624, 0.0
        %v737 = vmax.f32 %v629, 0.0
        %v738 = vmax.f32 %v632, 0.0
        %v739 = vmax.f32 %v637, 0.0
        %v740 = vmax.f32 %v640, 0.0
        %v741 = vmax.f32 %v645, 0.0
        %v742 = vmax.f32 %v648, 0.0
        %v743 = vmax.f32 %v653, 0.0
        %v744 = vmax.f32 %v656, 0.0
        %v745 = vmax.f32 %v661, 0.0
        %v746 = vmax.f32 %v664, 0.0
        %v747 = vmax.f32 %v669, 0.0
        %v748 = vmax.f32 %v672, 0.0
        %v749 = vmax.f32 %v677, 0.0
        %v750 = vmax.f32 %v680, 0.0
        %v751 = vmax.f32 %v685, 0.0
        %v752 = vmax.f32 %v688, 0.0
        %v753 = vmax.f32 %v693, 0.0
        %v754 = vmax.f32 %v696, 0.0
        %v755 = vmax.f32 %v701, 0.0
        %v756 = vmax.f32 %v704, 0.0
        %v757 = vmax.f32 %v709, 0.0
        %v758 = vmax.f32 %v712, 0.0
        %v759 = vmax.f32 %v717, 0.0
        %v760 = vmax.f32 %v720, 0.0
        %v761 = vmax.f32 %v725, 0.0
        %v762 = vmax.f32 %v728, 0.0
        %v763 = vpack.c.bf16 %v732, %v731
        %v764 = vpack.c.bf16 %v734, %v733
        %v765 = vpack.c.bf16 %v736, %v735
        %v766 = vpack.c.bf16 %v738, %v737
        %v767 = vpack.c.bf16 %v740, %v739
        %v768 = vpack.c.bf16 %v742, %v741
        %v769 = vpack.c.bf16 %v744, %v743
        %v770 = vpack.c.bf16 %v746, %v745
        %v771 = vpack.c.bf16 %v748, %v747
        %v772 = vpack.c.bf16 %v750, %v749
        %v773 = vpack.c.bf16 %v752, %v751
        %v774 = vpack.c.bf16 %v754, %v753
        %v775 = vpack.c.bf16 %v756, %v755
        %v776 = vpack.c.bf16 %v758, %v757
        %v777 = vpack.c.bf16 %v760, %v759
        %v778 = vpack.c.bf16 %v762, %v761
        %v795 = vunpack.c.l.b16 %v763
        %v796 = vunpack.c.h.b16 %v763
        %v797 = vunpack.c.l.b16 %v764
        %v798 = vunpack.c.h.b16 %v764
        %v799 = vunpack.c.l.b16 %v765
        %v800 = vunpack.c.h.b16 %v765
        %v801 = vunpack.c.l.b16 %v766
        %v802 = vunpack.c.h.b16 %v766
        %v803 = vunpack.c.l.b16 %v767
        %v804 = vunpack.c.h.b16 %v767
        %v805 = vunpack.c.l.b16 %v768
        %v806 = vunpack.c.h.b16 %v768
        %v807 = vunpack.c.l.b16 %v769
        %v808 = vunpack.c.h.b16 %v769
        %v809 = vunpack.c.l.b16 %v770
        %v810 = vunpack.c.h.b16 %v770
        %v811 = vunpack.c.l.b16 %v771
        %v812 = vunpack.c.h.b16 %v771
        %v813 = vunpack.c.l.b16 %v772
        %v814 = vunpack.c.h.b16 %v772
        %v815 = vunpack.c.l.b16 %v773
        %v816 = vunpack.c.h.b16 %v773
        %v817 = vunpack.c.l.b16 %v774
        %v818 = vunpack.c.h.b16 %v774
        %v819 = vunpack.c.l.b16 %v775
        %v820 = vunpack.c.h.b16 %v775
        %v821 = vunpack.c.l.b16 %v776
        %v822 = vunpack.c.h.b16 %v776
        %v823 = vunpack.c.l.b16 %v777
        %v824 = vunpack.c.h.b16 %v777
        %v825 = vunpack.c.l.b16 %v778
        %v826 = vunpack.c.h.b16 %v778
        %v827 = vpack.c.b16 %v795, %v795
        %v828 = vpack.c.b16 %v796, %v796
        %v829 = vpack.c.b16 %v797, %v797
        %v830 = vpack.c.b16 %v798, %v798
        %v831 = vpack.c.b16 %v799, %v799
        %v832 = vpack.c.b16 %v800, %v800
        %v833 = vpack.c.b16 %v801, %v801
        %v834 = vpack.c.b16 %v802, %v802
        %v835 = vpack.c.b16 %v803, %v803
        %v836 = vpack.c.b16 %v804, %v804
        %v837 = vpack.c.b16 %v805, %v805
        %v838 = vpack.c.b16 %v806, %v806
        %v839 = vpack.c.b16 %v807, %v807
        %v840 = vpack.c.b16 %v808, %v808
        %v841 = vpack.c.b16 %v809, %v809
        %v842 = vpack.c.b16 %v810, %v810
        %v843 = vpack.c.b16 %v811, %v811
        %v844 = vpack.c.b16 %v812, %v812
        %v845 = vpack.c.b16 %v813, %v813
        %v846 = vpack.c.b16 %v814, %v814
        %v847 = vpack.c.b16 %v815, %v815
        %v848 = vpack.c.b16 %v816, %v816
        %v849 = vpack.c.b16 %v817, %v817
        %v850 = vpack.c.b16 %v818, %v818
        %v851 = vpack.c.b16 %v819, %v819
        %v852 = vpack.c.b16 %v820, %v820
        %v853 = vpack.c.b16 %v821, %v821
        %v854 = vpack.c.b16 %v822, %v822
        %v855 = vpack.c.b16 %v823, %v823
        %v856 = vpack.c.b16 %v824, %v824
        %v857 = vpack.c.b16 %v825, %v825
        %v858 = vpack.c.b16 %v826, %v826
        %891 = vst [vmem:[%s236] sm:$0xf] %v827
        %892 = vst [vmem:[%s236 + $0x4] sm:$0xf] %v828
        %893 = vst [vmem:[%s236 + $0x8] sm:$0xf] %v829
        %894 = vst [vmem:[%s236 + $0xc] sm:$0xf] %v830
        %895 = vst [vmem:[%s236 + $0x10] sm:$0xf] %v831
        %896 = vst [vmem:[%s236 + $0x14] sm:$0xf] %v832
        %897 = vst [vmem:[%s236 + $0x18] sm:$0xf] %v833
        %898 = vst [vmem:[%s236 + $0x1c] sm:$0xf] %v834
        %899 = vst [vmem:[%s236 + $0x20] sm:$0xf] %v835
        %900 = vst [vmem:[%s236 + $0x24] sm:$0xf] %v836
        %901 = vst [vmem:[%s236 + $0x28] sm:$0xf] %v837
        %902 = vst [vmem:[%s236 + $0x2c] sm:$0xf] %v838
        %903 = vst [vmem:[%s236 + $0x30] sm:$0xf] %v839
        %904 = vst [vmem:[%s236 + $0x34] sm:$0xf] %v840
        %905 = vst [vmem:[%s236 + $0x38] sm:$0xf] %v841
        %906 = vst [vmem:[%s236 + $0x3c] sm:$0xf] %v842
        %907 = vst [vmem:[%s236 + $0x40] sm:$0xf] %v843
        %908 = vst [vmem:[%s236 + $0x44] sm:$0xf] %v844
        %909 = vst [vmem:[%s236 + $0x48] sm:$0xf] %v845
        %910 = vst [vmem:[%s236 + $0x4c] sm:$0xf] %v846
        %911 = vst [vmem:[%s236 + $0x50] sm:$0xf] %v847
        %912 = vst [vmem:[%s236 + $0x54] sm:$0xf] %v848
        %913 = vst [vmem:[%s236 + $0x58] sm:$0xf] %v849
        %914 = vst [vmem:[%s236 + $0x5c] sm:$0xf] %v850
        %915 = vst [vmem:[%s236 + $0x60] sm:$0xf] %v851
        %916 = vst [vmem:[%s236 + $0x64] sm:$0xf] %v852
        %917 = vst [vmem:[%s236 + $0x68] sm:$0xf] %v853
        %918 = vst [vmem:[%s236 + $0x6c] sm:$0xf] %v854
        %919 = vst [vmem:[%s236 + $0x70] sm:$0xf] %v855
        %920 = vst [vmem:[%s236 + $0x74] sm:$0xf] %v856
        %921 = vst [vmem:[%s236 + $0x78] sm:$0xf] %v857
        %922 = vst [vmem:[%s236 + $0x7c] sm:$0xf] %v858
        %s923 = sand.u32 %s121, 1
        %s924 = scalar_lea.sflag [#allocation4], %s923
        %s925 = sand.u32 %s121, 1
        %s926 = smul.addr %s925, 128
        %s927 = scalar_lea.vmem [#allocation7], %s926
        // Predicated region
        $region41: #{tpu_custom_call.1} parent=31 // pred_check
          %p928 = pneg %p131
        $region42: #{tpu_custom_call.1} parent=31 // pred_check_branch
          %930 = sbr.rel (%p928) target = $region44
        $region43: #{tpu_custom_call.1} parent=31 // pred_region
          %s931 = smul.u32 32, %s25
          %s933 = ssub.s32 2048, 2048
          %934 = vsyncadd %s924, %s933
          %s935 = sadd.s32 %s26, %s931
          %s936 = smul.addr %s935, 64
          %s937 = scalar_lea.hbm %s3, %s936
          %s938 = sshll.u32 %s927, 4
          %s939 = int_to_ptr.vmem [resolvable:$true] %s938
          %944 = dma.vmem_to_hbm [thread:$0]  %s939, 2048, %s937, %s924, 64, 64, 4
        $region44: #{tpu_custom_call.1} parent=31 // pred_fallthru
          _
      $region32: #{tpu_custom_call.1} parent=5 // pred_fallthru
        _
      %p945 = scmp.le.s32.totalorder 2, %s16
      // Predicated region
      $region45: #{tpu_custom_call.1} parent=5 // pred_check
        %p946 = pneg %p945
      $region46: #{tpu_custom_call.1} parent=5 // pred_check_branch
        %948 = sbr.rel (%p946) target = $region48
      $region47: #{tpu_custom_call.1} parent=5 // pred_region
        %s949 = ssub.s32 %s16, 2
        // Predicated region
        $region49: #{tpu_custom_call.1} parent=47 // pred_check
          %p950 = pneg %p137
        $region50: #{tpu_custom_call.1} parent=47 // pred_check_branch
          %952 = sbr.rel (%p950) target = $region52
        $region51: #{tpu_custom_call.1} parent=47 // pred_region
          %s953 = sand.u32 %s122, 1
          %s954 = scalar_lea.sflag [#allocation4], %s953
          %s955 = sand.u32 %s122, 1
          %s956 = smul.addr %s955, 128
          %s957 = scalar_lea.vmem [#allocation7], %s956
          %958 = dma.done %s954, 2048
        $region52: #{tpu_custom_call.1} parent=47 // pred_fallthru
          _
      $region48: #{tpu_custom_call.1} parent=5 // pred_fallthru
        _
    $region6: #{tpu_custom_call.1} parent=1 // loop_footer
      %s20 = sadd.s32 1, %s16
    $region7: #{tpu_custom_call.1} parent=1 // loop_footer_branch
      %15 = sbr.rel target = $region3
    $region8: #{tpu_custom_call.1} parent=1 // loop_exit
      _
    %959 = vsyncpa [#allocation3], 1
    %s960 = scalar_lea.sflag [#allocation3], 1
    %961 = vsyncpa %s960, 1
    %962 = vsyncpa [#allocation6], 1
    %963 = vsyncpa [#allocation4], 1
    %s964 = scalar_lea.sflag [#allocation4], 1
    %965 = vsyncpa %s964, 1

</llo_original>
